<compile_context>
chip_gen: v7x
topology: tpu7x:2x2x1
jax: 0.10.0
libtpu: 0.0.40
codegen_flags: <defaults>
</compile_context>

<pallas_src>
import math
import jax
import jax.numpy as jnp
from jax.experimental import pallas as pl
from jax.experimental.pallas import tpu as pltpu

D_MODEL = 32
N_HEAD = 4
HEAD_DIM = D_MODEL // N_HEAD
LN_EPS = 1e-5


def self_attention_kernel(x_ref, gamma_ref, beta_ref,
                          wqkv_ref, bqkv_ref, wo_ref, bo_ref, out_ref):
    # One sequence per grid step: x_ref is (L, D) (batch dim squeezed by BlockSpec).
    L, D = x_ref.shape
    x = x_ref[...]                                        # f32 pre-norm residual

    # --- LayerNorm (biased variance, eps inside sqrt, torch semantics), f32 ---
    mean = jnp.mean(x, axis=-1, keepdims=True)
    var = jnp.mean((x - mean) ** 2, axis=-1, keepdims=True)
    xn = (x - mean) * jax.lax.rsqrt(var + LN_EPS)
    xn = xn * gamma_ref[0] + beta_ref[0]

    # --- fused QKV projection: bf16 operands on the MXU, f32 accumulation ---
    # 1/sqrt(head_dim) is pre-folded into the Q rows of wqkv and the Q block of bqkv.
    qkv = jnp.dot(xn.astype(jnp.bfloat16), wqkv_ref[...],
                  preferred_element_type=jnp.float32) + bqkv_ref[0]
    q = qkv[:, 0 * D:1 * D]
    k = qkv[:, 1 * D:2 * D]
    v = qkv[:, 2 * D:3 * D]

    # Per-head attention (small & static: unrolled). No mask needed — each grid step sees
    # exactly one sequence.
    heads = []
    for h in range(N_HEAD):
        lo, hi = h * HEAD_DIM, (h + 1) * HEAD_DIM
        qh = q[:, lo:hi].astype(jnp.bfloat16)
        kh = k[:, lo:hi].astype(jnp.bfloat16)
        vh = v[:, lo:hi].astype(jnp.bfloat16)
        # scores = qh @ kh^T (contract last dim of both; no explicit transpose)
        s = jax.lax.dot_general(qh, kh, (((1,), (1,)), ((), ())),
                                preferred_element_type=jnp.float32)
        s = s - jnp.max(s, axis=-1, keepdims=True)
        p = jnp.exp(s)
        p = p / jnp.sum(p, axis=-1, keepdims=True)        # exact divide (f32 softmax)
        heads.append(jnp.dot(p.astype(jnp.bfloat16), vh,
                             preferred_element_type=jnp.float32))

    # Single output projection over the concatenated heads (1 matmul, contraction dim D
    # instead of 4 matmuls with contraction dim HEAD_DIM).
    o = jnp.concatenate(heads, axis=-1)                   # (L, D) f32
    y = jnp.dot(o.astype(jnp.bfloat16), wo_ref[...],
                preferred_element_type=jnp.float32) + bo_ref[0]

    # Dropout(self.drop) is identity at inference time; residual uses the pre-norm input.
    # Output kept in natural (L, D) layout — lane-dense slab not worth it at this size.
    out_ref[...] = (y + x).astype(out_ref.dtype)


def prepare_params(gamma, beta, wq, wk, wv, bq, bk, bv, wo, bo):
    """One-time parameter preparation (NOT per forward call):
       - fold the 1/sqrt(head_dim) attention scale into the Q projection,
       - fuse Wq/Wk/Wv into a single (D, 3D) matrix,
       - pre-cast matmul weights to bf16 (MXU-native); LN params and biases stay f32."""
    scale = 1.0 / math.sqrt(HEAD_DIM)
    wqkv = jnp.concatenate([wq * scale, wk, wv], axis=1).astype(jnp.bfloat16)   # (D, 3D)
    bqkv = jnp.concatenate([bq * scale, bk, bv], axis=1)                        # (1, 3D) f32
    return gamma, beta, wqkv, bqkv, wo.astype(jnp.bfloat16), bo


def self_attention(x, gamma, beta, wqkv, bqkv, wo, bo):
    B, L, D = x.shape
    assert D == D_MODEL

    def param(shape):
        # parameter arrays: whole array, same block every grid step
        return pl.BlockSpec(shape, lambda b: (0,) * len(shape))

    return pl.pallas_call(
        self_attention_kernel,
        out_shape=jax.ShapeDtypeStruct((B, L, D), x.dtype),
        grid=(B,),                                         # one sequence per step; both TCs on v7x
        in_specs=[
            pl.BlockSpec((None, L, D), lambda b: (b, 0, 0)),   # x: batch dim squeezed
            param((1, D)), param((1, D)),                      # LN gamma / beta (f32)
            param((D, 3 * D)), param((1, 3 * D)),              # fused Wqkv (bf16) / bqkv (f32)
            param((D, D)), param((1, D)),                      # Wo (bf16) / bo (f32)
        ],
        out_specs=pl.BlockSpec((None, L, D), lambda b: (b, 0, 0)),
        compiler_params=pltpu.CompilerParams(dimension_semantics=("parallel",)),
    )(x, gamma, beta, wqkv, bqkv, wo, bo)


def reference(x, gamma, beta, wq, wk, wv, bq, bk, bv, wo, bo):
    """Pure-JAX reference with torch eval-mode semantics.  Matmul operands are cast to
    bf16 (the kernel's declared MXU precision policy); accumulation, LayerNorm, softmax,
    biases and the residual are f32, matching the kernel."""
    B, L, D = x.shape
    f32, bf16 = jnp.float32, jnp.bfloat16
    scale = 1.0 / math.sqrt(HEAD_DIM)

    mean = jnp.mean(x, -1, keepdims=True)
    var = jnp.mean((x - mean) ** 2, -1, keepdims=True)
    xn = (x - mean) * jax.lax.rsqrt(var + LN_EPS) * gamma + beta

    q = jnp.dot(xn.astype(bf16), (wq * scale).astype(bf16),
                preferred_element_type=f32) + bq * scale
    k = jnp.dot(xn.astype(bf16), wk.astype(bf16), preferred_element_type=f32) + bk
    v = jnp.dot(xn.astype(bf16), wv.astype(bf16), preferred_element_type=f32) + bv

    qh = q.reshape(B, L, N_HEAD, HEAD_DIM).transpose(0, 2, 1, 3)
    kh = k.reshape(B, L, N_HEAD, HEAD_DIM).transpose(0, 2, 1, 3)
    vh = v.reshape(B, L, N_HEAD, HEAD_DIM).transpose(0, 2, 1, 3)

    s = jnp.einsum("bhqd,bhkd->bhqk", qh.astype(bf16), kh.astype(bf16),
                   preferred_element_type=f32)
    p = jax.nn.softmax(s, axis=-1)
    o = jnp.einsum("bhqk,bhkd->bhqd", p.astype(bf16), vh.astype(bf16),
                   preferred_element_type=f32)
    o = o.transpose(0, 2, 1, 3).reshape(B, L, D)
    return jnp.dot(o.astype(bf16), wo.astype(bf16), preferred_element_type=f32) + bo + x


if __name__ == "__main__":
    B, L = 2, 8
    key = jax.random.PRNGKey(0)
    ks = jax.random.split(key, 11)

    x = jax.random.normal(ks[0], (B, L, D_MODEL), dtype=jnp.float32)

    # Deterministic synthetic parameters (shapes from nn.LayerNorm / nn.MultiheadAttention,
    # stored pre-transposed so y = x @ W + b).
    std = 1.0 / math.sqrt(D_MODEL)
    gamma = 1.0 + 0.1 * jax.random.normal(ks[9], (1, D_MODEL), jnp.float32)
    beta = 0.02 * jax.random.normal(ks[10], (1, D_MODEL), jnp.float32)
    wq = jax.random.normal(ks[1], (D_MODEL, D_MODEL), jnp.float32) * std
    wk = jax.random.normal(ks[2], (D_MODEL, D_MODEL), jnp.float32) * std
    wv = jax.random.normal(ks[3], (D_MODEL, D_MODEL), jnp.float32) * std
    wo = jax.random.normal(ks[4], (D_MODEL, D_MODEL), jnp.float32) * std
    bq = jax.random.normal(ks[5], (1, D_MODEL), jnp.float32) * 0.02
    bk = jax.random.normal(ks[6], (1, D_MODEL), jnp.float32) * 0.02
    bv = jax.random.normal(ks[7], (1, D_MODEL), jnp.float32) * 0.02
    bo = jax.random.normal(ks[8], (1, D_MODEL), jnp.float32) * 0.02

    # One-time parameter prep (fusion / scale folding / bf16 weight cast) — not per call.
    p_gamma, p_beta, wqkv, bqkv, wo_bf16, bo_f32 = prepare_params(
        gamma, beta, wq, wk, wv, bq, bk, bv, wo, bo)

    out = self_attention(x, p_gamma, p_beta, wqkv, bqkv, wo_bf16, bo_f32)
    out = jax.block_until_ready(out)

    ref = reference(x, gamma, beta, wq, wk, wv, bq, bk, bv, wo, bo)
    assert out.shape == (B, L, D_MODEL)
    # Both sides use bf16 matmul operands with f32 accumulation; tolerance leaves headroom
    # only for accumulation-order / transcendental differences between Mosaic and XLA.
    assert jnp.allclose(out, ref, atol=5e-3, rtol=5e-3), "mismatch vs pure-JAX reference"

    print("KERNEL_OK")
</pallas_src>

<mosaic_0001>
module attributes {stable_mosaic.version = 11 : i64} {
  func.func @self_attention_kernel(%arg0: i32, %arg1: memref<1x8x32xf32, #tpu.memory_space<vmem>>, %arg2: memref<1x32xf32, #tpu.memory_space<vmem>>, %arg3: memref<1x32xf32, #tpu.memory_space<vmem>>, %arg4: memref<32x96xbf16, #tpu.memory_space<vmem>>, %arg5: memref<1x96xf32, #tpu.memory_space<vmem>>, %arg6: memref<32x32xbf16, #tpu.memory_space<vmem>>, %arg7: memref<1x32xf32, #tpu.memory_space<vmem>>, %arg8: memref<1x8x32xf32, #tpu.memory_space<vmem>>) attributes {dimension_semantics = [#tpu.dimension_semantics<parallel>], iteration_bounds = array<i64: 2>, scalar_prefetch = 0 : i64, scratch_operands = 0 : i64, tpu.core_type = #tpu.core_type<tc>, window_params = [{transform_indices = @transform_0, window_bounds = array<i64: 1, 8, 32>}, {pipeline_mode = #tpu.pipeline_mode<synchronous>, transform_indices = @transform_1, window_bounds = array<i64: 1, 32>}, {pipeline_mode = #tpu.pipeline_mode<synchronous>, transform_indices = @transform_2, window_bounds = array<i64: 1, 32>}, {pipeline_mode = #tpu.pipeline_mode<synchronous>, transform_indices = @transform_3, window_bounds = array<i64: 32, 96>}, {pipeline_mode = #tpu.pipeline_mode<synchronous>, transform_indices = @transform_4, window_bounds = array<i64: 1, 96>}, {pipeline_mode = #tpu.pipeline_mode<synchronous>, transform_indices = @transform_5, window_bounds = array<i64: 32, 32>}, {pipeline_mode = #tpu.pipeline_mode<synchronous>, transform_indices = @transform_6, window_bounds = array<i64: 1, 32>}, {transform_indices = @transform_7, window_bounds = array<i64: 1, 8, 32>}]} {
    %c0 = arith.constant 0 : index
    %c0_0 = arith.constant 0 : index
    %c0_1 = arith.constant 0 : index
    %0 = vector.load %arg1[%c0, %c0_0, %c0_1] : memref<1x8x32xf32, #tpu.memory_space<vmem>>, vector<1x8x32xf32>
    %1 = vector.shape_cast %0 : vector<1x8x32xf32> to vector<8x32xf32>
    %cst = arith.constant dense<0.000000e+00> : vector<8xf32>
    %2 = vector.multi_reduction <add>, %1, %cst [1] : vector<8x32xf32> to vector<8xf32>
    %3 = vector.shape_cast %2 : vector<8xf32> to vector<8x1xf32>
    %cst_2 = arith.constant 3.200000e+01 : f32
    %4 = vector.broadcast %cst_2 : f32 to vector<8x1xf32>
    %5 = arith.divf %3, %4 : vector<8x1xf32>
    %6 = vector.broadcast %5 : vector<8x1xf32> to vector<8x32xf32>
    %7 = arith.subf %1, %6 : vector<8x32xf32>
    %8 = arith.mulf %7, %7 : vector<8x32xf32>
    %cst_3 = arith.constant dense<0.000000e+00> : vector<8xf32>
    %9 = vector.multi_reduction <add>, %8, %cst_3 [1] : vector<8x32xf32> to vector<8xf32>
    %10 = vector.shape_cast %9 : vector<8xf32> to vector<8x1xf32>
    %cst_4 = arith.constant 3.200000e+01 : f32
    %11 = vector.broadcast %cst_4 : f32 to vector<8x1xf32>
    %12 = arith.divf %10, %11 : vector<8x1xf32>
    %13 = vector.broadcast %5 : vector<8x1xf32> to vector<8x32xf32>
    %14 = arith.subf %1, %13 : vector<8x32xf32>
    %cst_5 = arith.constant 9.99999974E-6 : f32
    %15 = vector.broadcast %cst_5 : f32 to vector<8x1xf32>
    %16 = arith.addf %12, %15 : vector<8x1xf32>
    %17 = math.rsqrt %16 : vector<8x1xf32>
    %18 = vector.broadcast %17 : vector<8x1xf32> to vector<8x32xf32>
    %19 = arith.mulf %14, %18 : vector<8x32xf32>
    %c0_6 = arith.constant 0 : index
    %c0_7 = arith.constant 0 : index
    %20 = vector.load %arg2[%c0_6, %c0_7] : memref<1x32xf32, #tpu.memory_space<vmem>>, vector<1x32xf32>
    %21 = vector.shape_cast %20 : vector<1x32xf32> to vector<32xf32>
    %22 = vector.shape_cast %21 : vector<32xf32> to vector<1x32xf32>
    %23 = vector.broadcast %22 : vector<1x32xf32> to vector<8x32xf32>
    %24 = arith.mulf %19, %23 : vector<8x32xf32>
    %c0_8 = arith.constant 0 : index
    %c0_9 = arith.constant 0 : index
    %25 = vector.load %arg3[%c0_8, %c0_9] : memref<1x32xf32, #tpu.memory_space<vmem>>, vector<1x32xf32>
    %26 = vector.shape_cast %25 : vector<1x32xf32> to vector<32xf32>
    %27 = vector.shape_cast %26 : vector<32xf32> to vector<1x32xf32>
    %28 = vector.broadcast %27 : vector<1x32xf32> to vector<8x32xf32>
    %29 = arith.addf %24, %28 : vector<8x32xf32>
    %30 = arith.truncf %29 : vector<8x32xf32> to vector<8x32xbf16>
    %c0_10 = arith.constant 0 : index
    %c0_11 = arith.constant 0 : index
    %31 = vector.load %arg4[%c0_10, %c0_11] : memref<32x96xbf16, #tpu.memory_space<vmem>>, vector<32x96xbf16>
    %cst_12 = arith.constant dense<0.000000e+00> : vector<8x96xf32>
    %32 = tpu.matmul %30, %31, %cst_12 {dimension_numbers = #tpu.dot_dimension_numbers<[1], [0], [0], [1], [0, 0, 1, 1], [], []>} : vector<8x32xbf16>, vector<32x96xbf16>, vector<8x96xf32> -> vector<8x96xf32>
    %c0_13 = arith.constant 0 : index
    %c0_14 = arith.constant 0 : index
    %33 = vector.load %arg5[%c0_13, %c0_14] : memref<1x96xf32, #tpu.memory_space<vmem>>, vector<1x96xf32>
    %34 = vector.shape_cast %33 : vector<1x96xf32> to vector<96xf32>
    %35 = vector.shape_cast %34 : vector<96xf32> to vector<1x96xf32>
    %36 = vector.broadcast %35 : vector<1x96xf32> to vector<8x96xf32>
    %37 = arith.addf %32, %36 : vector<8x96xf32>
    %38 = vector.extract_strided_slice %37 {offsets = [0, 0], sizes = [8, 32], strides = [1, 1]} : vector<8x96xf32> to vector<8x32xf32>
    %39 = vector.extract_strided_slice %37 {offsets = [0, 32], sizes = [8, 32], strides = [1, 1]} : vector<8x96xf32> to vector<8x32xf32>
    %40 = vector.extract_strided_slice %37 {offsets = [0, 64], sizes = [8, 32], strides = [1, 1]} : vector<8x96xf32> to vector<8x32xf32>
    %41 = vector.extract_strided_slice %38 {offsets = [0, 0], sizes = [8, 8], strides = [1, 1]} : vector<8x32xf32> to vector<8x8xf32>
    %42 = arith.truncf %41 : vector<8x8xf32> to vector<8x8xbf16>
    %43 = vector.extract_strided_slice %39 {offsets = [0, 0], sizes = [8, 8], strides = [1, 1]} : vector<8x32xf32> to vector<8x8xf32>
    %44 = arith.truncf %43 : vector<8x8xf32> to vector<8x8xbf16>
    %45 = vector.extract_strided_slice %40 {offsets = [0, 0], sizes = [8, 8], strides = [1, 1]} : vector<8x32xf32> to vector<8x8xf32>
    %46 = arith.truncf %45 : vector<8x8xf32> to vector<8x8xbf16>
    %cst_15 = arith.constant dense<0.000000e+00> : vector<8x8xf32>
    %47 = tpu.matmul %42, %44, %cst_15 {dimension_numbers = #tpu.dot_dimension_numbers<[1], [1], [0], [0], [0, 0, 1, 0], [], []>} : vector<8x8xbf16>, vector<8x8xbf16>, vector<8x8xf32> -> vector<8x8xf32>
    %cst_16 = arith.constant dense<0xFF800000> : vector<8xf32>
    %48 = vector.multi_reduction <maximumf>, %47, %cst_16 [1] : vector<8x8xf32> to vector<8xf32>
    %49 = vector.shape_cast %48 : vector<8xf32> to vector<8x1xf32>
    %50 = vector.broadcast %49 : vector<8x1xf32> to vector<8x8xf32>
    %51 = arith.subf %47, %50 : vector<8x8xf32>
    %52 = math.exp %51 : vector<8x8xf32>
    %cst_17 = arith.constant dense<0.000000e+00> : vector<8xf32>
    %53 = vector.multi_reduction <add>, %52, %cst_17 [1] : vector<8x8xf32> to vector<8xf32>
    %54 = vector.shape_cast %53 : vector<8xf32> to vector<8x1xf32>
    %55 = vector.broadcast %54 : vector<8x1xf32> to vector<8x8xf32>
    %56 = arith.divf %52, %55 : vector<8x8xf32>
    %57 = arith.truncf %56 : vector<8x8xf32> to vector<8x8xbf16>
    %cst_18 = arith.constant dense<0.000000e+00> : vector<8x8xf32>
    %58 = tpu.matmul %57, %46, %cst_18 {dimension_numbers = #tpu.dot_dimension_numbers<[1], [0], [0], [1], [0, 0, 1, 1], [], []>} : vector<8x8xbf16>, vector<8x8xbf16>, vector<8x8xf32> -> vector<8x8xf32>
    %59 = vector.extract_strided_slice %38 {offsets = [0, 8], sizes = [8, 8], strides = [1, 1]} : vector<8x32xf32> to vector<8x8xf32>
    %60 = arith.truncf %59 : vector<8x8xf32> to vector<8x8xbf16>
    %61 = vector.extract_strided_slice %39 {offsets = [0, 8], sizes = [8, 8], strides = [1, 1]} : vector<8x32xf32> to vector<8x8xf32>
    %62 = arith.truncf %61 : vector<8x8xf32> to vector<8x8xbf16>
    %63 = vector.extract_strided_slice %40 {offsets = [0, 8], sizes = [8, 8], strides = [1, 1]} : vector<8x32xf32> to vector<8x8xf32>
    %64 = arith.truncf %63 : vector<8x8xf32> to vector<8x8xbf16>
    %cst_19 = arith.constant dense<0.000000e+00> : vector<8x8xf32>
    %65 = tpu.matmul %60, %62, %cst_19 {dimension_numbers = #tpu.dot_dimension_numbers<[1], [1], [0], [0], [0, 0, 1, 0], [], []>} : vector<8x8xbf16>, vector<8x8xbf16>, vector<8x8xf32> -> vector<8x8xf32>
    %cst_20 = arith.constant dense<0xFF800000> : vector<8xf32>
    %66 = vector.multi_reduction <maximumf>, %65, %cst_20 [1] : vector<8x8xf32> to vector<8xf32>
    %67 = vector.shape_cast %66 : vector<8xf32> to vector<8x1xf32>
    %68 = vector.broadcast %67 : vector<8x1xf32> to vector<8x8xf32>
    %69 = arith.subf %65, %68 : vector<8x8xf32>
    %70 = math.exp %69 : vector<8x8xf32>
    %cst_21 = arith.constant dense<0.000000e+00> : vector<8xf32>
    %71 = vector.multi_reduction <add>, %70, %cst_21 [1] : vector<8x8xf32> to vector<8xf32>
    %72 = vector.shape_cast %71 : vector<8xf32> to vector<8x1xf32>
    %73 = vector.broadcast %72 : vector<8x1xf32> to vector<8x8xf32>
    %74 = arith.divf %70, %73 : vector<8x8xf32>
    %75 = arith.truncf %74 : vector<8x8xf32> to vector<8x8xbf16>
    %cst_22 = arith.constant dense<0.000000e+00> : vector<8x8xf32>
    %76 = tpu.matmul %75, %64, %cst_22 {dimension_numbers = #tpu.dot_dimension_numbers<[1], [0], [0], [1], [0, 0, 1, 1], [], []>} : vector<8x8xbf16>, vector<8x8xbf16>, vector<8x8xf32> -> vector<8x8xf32>
    %77 = vector.extract_strided_slice %38 {offsets = [0, 16], sizes = [8, 8], strides = [1, 1]} : vector<8x32xf32> to vector<8x8xf32>
    %78 = arith.truncf %77 : vector<8x8xf32> to vector<8x8xbf16>
    %79 = vector.extract_strided_slice %39 {offsets = [0, 16], sizes = [8, 8], strides = [1, 1]} : vector<8x32xf32> to vector<8x8xf32>
    %80 = arith.truncf %79 : vector<8x8xf32> to vector<8x8xbf16>
    %81 = vector.extract_strided_slice %40 {offsets = [0, 16], sizes = [8, 8], strides = [1, 1]} : vector<8x32xf32> to vector<8x8xf32>
    %82 = arith.truncf %81 : vector<8x8xf32> to vector<8x8xbf16>
    %cst_23 = arith.constant dense<0.000000e+00> : vector<8x8xf32>
    %83 = tpu.matmul %78, %80, %cst_23 {dimension_numbers = #tpu.dot_dimension_numbers<[1], [1], [0], [0], [0, 0, 1, 0], [], []>} : vector<8x8xbf16>, vector<8x8xbf16>, vector<8x8xf32> -> vector<8x8xf32>
    %cst_24 = arith.constant dense<0xFF800000> : vector<8xf32>
    %84 = vector.multi_reduction <maximumf>, %83, %cst_24 [1] : vector<8x8xf32> to vector<8xf32>
    %85 = vector.shape_cast %84 : vector<8xf32> to vector<8x1xf32>
    %86 = vector.broadcast %85 : vector<8x1xf32> to vector<8x8xf32>
    %87 = arith.subf %83, %86 : vector<8x8xf32>
    %88 = math.exp %87 : vector<8x8xf32>
    %cst_25 = arith.constant dense<0.000000e+00> : vector<8xf32>
    %89 = vector.multi_reduction <add>, %88, %cst_25 [1] : vector<8x8xf32> to vector<8xf32>
    %90 = vector.shape_cast %89 : vector<8xf32> to vector<8x1xf32>
    %91 = vector.broadcast %90 : vector<8x1xf32> to vector<8x8xf32>
    %92 = arith.divf %88, %91 : vector<8x8xf32>
    %93 = arith.truncf %92 : vector<8x8xf32> to vector<8x8xbf16>
    %cst_26 = arith.constant dense<0.000000e+00> : vector<8x8xf32>
    %94 = tpu.matmul %93, %82, %cst_26 {dimension_numbers = #tpu.dot_dimension_numbers<[1], [0], [0], [1], [0, 0, 1, 1], [], []>} : vector<8x8xbf16>, vector<8x8xbf16>, vector<8x8xf32> -> vector<8x8xf32>
    %95 = vector.extract_strided_slice %38 {offsets = [0, 24], sizes = [8, 8], strides = [1, 1]} : vector<8x32xf32> to vector<8x8xf32>
    %96 = arith.truncf %95 : vector<8x8xf32> to vector<8x8xbf16>
    %97 = vector.extract_strided_slice %39 {offsets = [0, 24], sizes = [8, 8], strides = [1, 1]} : vector<8x32xf32> to vector<8x8xf32>
    %98 = arith.truncf %97 : vector<8x8xf32> to vector<8x8xbf16>
    %99 = vector.extract_strided_slice %40 {offsets = [0, 24], sizes = [8, 8], strides = [1, 1]} : vector<8x32xf32> to vector<8x8xf32>
    %100 = arith.truncf %99 : vector<8x8xf32> to vector<8x8xbf16>
    %cst_27 = arith.constant dense<0.000000e+00> : vector<8x8xf32>
    %101 = tpu.matmul %96, %98, %cst_27 {dimension_numbers = #tpu.dot_dimension_numbers<[1], [1], [0], [0], [0, 0, 1, 0], [], []>} : vector<8x8xbf16>, vector<8x8xbf16>, vector<8x8xf32> -> vector<8x8xf32>
    %cst_28 = arith.constant dense<0xFF800000> : vector<8xf32>
    %102 = vector.multi_reduction <maximumf>, %101, %cst_28 [1] : vector<8x8xf32> to vector<8xf32>
    %103 = vector.shape_cast %102 : vector<8xf32> to vector<8x1xf32>
    %104 = vector.broadcast %103 : vector<8x1xf32> to vector<8x8xf32>
    %105 = arith.subf %101, %104 : vector<8x8xf32>
    %106 = math.exp %105 : vector<8x8xf32>
    %cst_29 = arith.constant dense<0.000000e+00> : vector<8xf32>
    %107 = vector.multi_reduction <add>, %106, %cst_29 [1] : vector<8x8xf32> to vector<8xf32>
    %108 = vector.shape_cast %107 : vector<8xf32> to vector<8x1xf32>
    %109 = vector.broadcast %108 : vector<8x1xf32> to vector<8x8xf32>
    %110 = arith.divf %106, %109 : vector<8x8xf32>
    %111 = arith.truncf %110 : vector<8x8xf32> to vector<8x8xbf16>
    %cst_30 = arith.constant dense<0.000000e+00> : vector<8x8xf32>
    %112 = tpu.matmul %111, %100, %cst_30 {dimension_numbers = #tpu.dot_dimension_numbers<[1], [0], [0], [1], [0, 0, 1, 1], [], []>} : vector<8x8xbf16>, vector<8x8xbf16>, vector<8x8xf32> -> vector<8x8xf32>
    %113 = tpu.concatenate %58, %76, %94, %112 in 1 : vector<8x8xf32>, vector<8x8xf32>, vector<8x8xf32>, vector<8x8xf32> -> vector<8x32xf32>
    %114 = arith.truncf %113 : vector<8x32xf32> to vector<8x32xbf16>
    %c0_31 = arith.constant 0 : index
    %c0_32 = arith.constant 0 : index
    %115 = vector.load %arg6[%c0_31, %c0_32] : memref<32x32xbf16, #tpu.memory_space<vmem>>, vector<32x32xbf16>
    %cst_33 = arith.constant dense<0.000000e+00> : vector<8x32xf32>
    %116 = tpu.matmul %114, %115, %cst_33 {dimension_numbers = #tpu.dot_dimension_numbers<[1], [0], [0], [1], [0, 0, 1, 1], [], []>} : vector<8x32xbf16>, vector<32x32xbf16>, vector<8x32xf32> -> vector<8x32xf32>
    %c0_34 = arith.constant 0 : index
    %c0_35 = arith.constant 0 : index
    %117 = vector.load %arg7[%c0_34, %c0_35] : memref<1x32xf32, #tpu.memory_space<vmem>>, vector<1x32xf32>
    %118 = vector.shape_cast %117 : vector<1x32xf32> to vector<32xf32>
    %119 = vector.shape_cast %118 : vector<32xf32> to vector<1x32xf32>
    %120 = vector.broadcast %119 : vector<1x32xf32> to vector<8x32xf32>
    %121 = arith.addf %116, %120 : vector<8x32xf32>
    %122 = arith.addf %121, %1 : vector<8x32xf32>
    %c0_36 = arith.constant 0 : index
    %c0_37 = arith.constant 0 : index
    %c0_38 = arith.constant 0 : index
    %123 = vector.load %arg8[%c0_36, %c0_37, %c0_38] : memref<1x8x32xf32, #tpu.memory_space<vmem>>, vector<1x8x32xf32>
    %124 = vector.shape_cast %123 : vector<1x8x32xf32> to vector<8x32xf32>
    %125 = vector.shape_cast %122 : vector<8x32xf32> to vector<1x8x32xf32>
    tpu.vector_store %arg8[%c0_36, %c0_37, %c0_38], %125 {strides = array<i32>} : memref<1x8x32xf32, #tpu.memory_space<vmem>>, vector<1x8x32xf32>,
    return
  }
  func.func @transform_0(%arg0: i32) -> (i32, i32, i32) {
    %c0_i32 = arith.constant 0 : i32
    %c0_i32_0 = arith.constant 0 : i32
    %c0_i32_1 = arith.constant 0 : i32
    return %arg0, %c0_i32, %c0_i32_0 : i32, i32, i32
  }
  func.func @transform_1(%arg0: i32) -> (i32, i32) {
    %c0_i32 = arith.constant 0 : i32
    %c0_i32_0 = arith.constant 0 : i32
    %c0_i32_1 = arith.constant 0 : i32
    return %c0_i32, %c0_i32_0 : i32, i32
  }
  func.func @transform_2(%arg0: i32) -> (i32, i32) {
    %c0_i32 = arith.constant 0 : i32
    %c0_i32_0 = arith.constant 0 : i32
    %c0_i32_1 = arith.constant 0 : i32
    return %c0_i32, %c0_i32_0 : i32, i32
  }
  func.func @transform_3(%arg0: i32) -> (i32, i32) {
    %c0_i32 = arith.constant 0 : i32
    %c0_i32_0 = arith.constant 0 : i32
    %c0_i32_1 = arith.constant 0 : i32
    return %c0_i32, %c0_i32_0 : i32, i32
  }
  func.func @transform_4(%arg0: i32) -> (i32, i32) {
    %c0_i32 = arith.constant 0 : i32
    %c0_i32_0 = arith.constant 0 : i32
    %c0_i32_1 = arith.constant 0 : i32
    return %c0_i32, %c0_i32_0 : i32, i32
  }
  func.func @transform_5(%arg0: i32) -> (i32, i32) {
    %c0_i32 = arith.constant 0 : i32
    %c0_i32_0 = arith.constant 0 : i32
    %c0_i32_1 = arith.constant 0 : i32
    return %c0_i32, %c0_i32_0 : i32, i32
  }
  func.func @transform_6(%arg0: i32) -> (i32, i32) {
    %c0_i32 = arith.constant 0 : i32
    %c0_i32_0 = arith.constant 0 : i32
    %c0_i32_1 = arith.constant 0 : i32
    return %c0_i32, %c0_i32_0 : i32, i32
  }
  func.func @transform_7(%arg0: i32) -> (i32, i32, i32) {
    %c0_i32 = arith.constant 0 : i32
    %c0_i32_0 = arith.constant 0 : i32
    %c0_i32_1 = arith.constant 0 : i32
    return %arg0, %c0_i32, %c0_i32_0 : i32, i32, i32
  }
}

</mosaic_0001>

<llo_original>
// kernel: tpu_custom_call.1
$region0: #{tpu_custom_call.1}
  #allocation0 [shape = 'u32[]', space=smem, size = 0x4, offset = 0x4, fixed_abs, tag = 'smem constant byte address 0x4 - core index']
  #allocation1 [shape = 'u32[144,128]{1,0:T(1,128)}', space=vmem, size = 0x12000, scoped, tag = 'internal scratch']
  %s0 = inlined_call_operand.hbm [shape: f32[2,8,32], index: 0, kind: input, shape index: {}]
  %s1 = inlined_call_operand.vmem [shape: f32[1,32], index: 1, kind: input, shape index: {}]
  %s2 = inlined_call_operand.vmem [shape: f32[1,32], index: 2, kind: input, shape index: {}]
  %s3 = inlined_call_operand.hbm [shape: bf16[32,96], index: 3, kind: input, shape index: {}]
  %s4 = inlined_call_operand.hbm [shape: f32[1,96], index: 4, kind: input, shape index: {}]
  %s5 = inlined_call_operand.vmem [shape: bf16[32,32], index: 5, kind: input, shape index: {}]
  %s6 = inlined_call_operand.vmem [shape: f32[1,32], index: 6, kind: input, shape index: {}]
  %s7 = inlined_call_operand.hbm [shape: f32[2,8,32], index: 7, kind: output, shape index: {}]
  %s8 = sld [smem:[#allocation0]]
  $region73: #{tpu_custom_call.1} parent=0
    _
  %s10 = ssub.s32 1, %s8
  %s11 = scalar_select 0, %s10, %s8
  $region1: #{tpu_custom_call.1} parent=0
    #allocation2 [shape = 'u8[8192]{0}', space=vmem, size = 0x2000, scoped, tag = 'input window, operand 0']
    #allocation3 [shape = 's32[2]{0}', space=sflag, size = 0x8, scoped, tag = 'scoped memory for tpu_custom_call.1']
    #allocation4 [shape = 's32[2]{0}', space=sflag, size = 0x8, scoped, tag = 'scoped memory for tpu_custom_call.1']
    #allocation5 [shape = 'u8[8192]{0}', space=vmem, size = 0x2000, scoped, tag = 'input window, operand 3, single buffered']
    #allocation6 [shape = 's32[1]{0}', space=sflag, size = 0x4, scoped, tag = 'scoped memory for tpu_custom_call.1']
    #allocation7 [shape = 'u8[512]{0}', space=vmem, size = 0x400, scoped, tag = 'input window, operand 4, single buffered']
    #allocation8 [shape = 'u8[8192]{0}', space=vmem, size = 0x2000, scoped, tag = 'output window, operand 0']
    %12 = vsyncpa [#allocation3], 0
    %s13 = scalar_lea.sflag [#allocation3], 1
    %14 = vsyncpa %s13, 0
    %15 = vsyncpa [#allocation6], 0
    %16 = vsyncpa [#allocation4], 0
    %s17 = scalar_lea.sflag [#allocation4], 1
    %18 = vsyncpa %s17, 0
    loop: start=0, step=1, limit=4
    $region2: #{tpu_custom_call.1} parent=1 // loop_pre_header
      _
    $region3: #{tpu_custom_call.1} parent=1 // loop_header
      %s20 = sphi 0, %s24
      %p21 = scmp.ge.s32.totalorder %s20, 4
      %s30 = sphi 0, %s32
      %s33 = sphi 0, %s30
      %s34 = sphi 0, %s33
      %s50 = sphi 0, %s34
      %s54 = sphi 0, %s54
      %s56 = sphi 0, %s54
      %s57 = sphi 0, %s56
      %s71 = sphi 0, %s57
      %s75 = sphi 0, %s75
      %s77 = sphi 0, %s75
      %s78 = sphi 0, %s77
      %s92 = sphi 0, %s78
      %s96 = sphi 0, %s96
      %s98 = sphi 0, %s96
      %s99 = sphi 0, %s98
      %s113 = sphi 0, %s99
      %s117 = sphi 0, %s117
      %s119 = sphi 0, %s117
      %s120 = sphi 0, %s119
      %s134 = sphi 0, %s120
      %s138 = sphi 0, %s138
      %s140 = sphi 0, %s138
      %s141 = sphi 0, %s140
      %s155 = sphi 0, %s141
      %s159 = sphi 0, %s159
      %s161 = sphi 0, %s159
      %s162 = sphi 0, %s161
      %s176 = sphi 0, %s162
      %s182 = sphi 0, %s184
      %s185 = sphi 0, %s182
      %s186 = sphi 0, %s185
      %s202 = sphi 0, %s186
    $region4: #{tpu_custom_call.1} parent=1 // loop_header_branch
      %23 = sbr.rel (%p21) target = $region8
    $region5: #{tpu_custom_call.1} parent=1 // loop_body
      %s25 = ssub.s32 %s20, 1
      %s26 = ssub.s32 %s20, 2
      %s27 = sadd.s32 %s20, 1
      %s28 = ssub.s32 %s20, %s27
      %p29 = scmp.eq.s32.totalorder %s28, 0
      %s31 = sadd.s32 %s30, 1
      %s32 = scalar_select %p29, %s30, %s31
      %p35 = pneg %p29
      %p36 = scmp.eq.s32.totalorder %s20, 1
      %p37 = por %p35, %p36
      %p38 = scmp.ne.s32.totalorder %s30, %s33
      %p39 = scmp.eq.s32.totalorder %s20, 0
      %p40 = por %p38, %p39
      %p41 = scmp.ne.s32.totalorder %s30, %s33
      %p42 = scmp.eq.s32.totalorder %s25, 1
      %p43 = por %p41, %p42
      %p44 = scmp.ne.s32.totalorder %s33, %s34
      %p45 = scmp.eq.s32.totalorder %s25, 0
      %p46 = por %p44, %p45
      %p47 = scmp.ne.s32.totalorder %s33, %s34
      %p48 = scmp.eq.s32.totalorder %s26, 1
      %p49 = por %p47, %p48
      %p51 = scmp.ne.s32.totalorder %s34, %s50
      %p52 = scmp.eq.s32.totalorder %s26, 0
      %p53 = por %p51, %p52
      %s55 = sadd.s32 %s54, 1
      %p58 = scmp.eq.s32.totalorder %s20, 1
      %p59 = scmp.ne.s32.totalorder %s54, %s56
      %p60 = scmp.eq.s32.totalorder %s20, 0
      %p61 = por %p59, %p60
      %p62 = scmp.ne.s32.totalorder %s54, %s56
      %p63 = scmp.eq.s32.totalorder %s25, 1
      %p64 = por %p62, %p63
      %p65 = scmp.ne.s32.totalorder %s56, %s57
      %p66 = scmp.eq.s32.totalorder %s25, 0
      %p67 = por %p65, %p66
      %p68 = scmp.ne.s32.totalorder %s56, %s57
      %p69 = scmp.eq.s32.totalorder %s26, 1
      %p70 = por %p68, %p69
      %p72 = scmp.ne.s32.totalorder %s57, %s71
      %p73 = scmp.eq.s32.totalorder %s26, 0
      %p74 = por %p72, %p73
      %s76 = sadd.s32 %s75, 1
      %p79 = scmp.eq.s32.totalorder %s20, 1
      %p80 = scmp.ne.s32.totalorder %s75, %s77
      %p81 = scmp.eq.s32.totalorder %s20, 0
      %p82 = por %p80, %p81
      %p83 = scmp.ne.s32.totalorder %s75, %s77
      %p84 = scmp.eq.s32.totalorder %s25, 1
      %p85 = por %p83, %p84
      %p86 = scmp.ne.s32.totalorder %s77, %s78
      %p87 = scmp.eq.s32.totalorder %s25, 0
      %p88 = por %p86, %p87
      %p89 = scmp.ne.s32.totalorder %s77, %s78
      %p90 = scmp.eq.s32.totalorder %s26, 1
      %p91 = por %p89, %p90
      %p93 = scmp.ne.s32.totalorder %s78, %s92
      %p94 = scmp.eq.s32.totalorder %s26, 0
      %p95 = por %p93, %p94
      %s97 = sadd.s32 %s96, 1
      %p100 = scmp.eq.s32.totalorder %s20, 1
      %p101 = scmp.ne.s32.totalorder %s96, %s98
      %p102 = scmp.eq.s32.totalorder %s20, 0
      %p103 = por %p101, %p102
      %p104 = scmp.ne.s32.totalorder %s96, %s98
      %p105 = scmp.eq.s32.totalorder %s25, 1
      %p106 = por %p104, %p105
      %p107 = scmp.ne.s32.totalorder %s98, %s99
      %p108 = scmp.eq.s32.totalorder %s25, 0
      %p109 = por %p107, %p108
      %p110 = scmp.ne.s32.totalorder %s98, %s99
      %p111 = scmp.eq.s32.totalorder %s26, 1
      %p112 = por %p110, %p111
      %p114 = scmp.ne.s32.totalorder %s99, %s113
      %p115 = scmp.eq.s32.totalorder %s26, 0
      %p116 = por %p114, %p115
      %s118 = sadd.s32 %s117, 1
      %p121 = scmp.eq.s32.totalorder %s20, 1
      %p122 = scmp.ne.s32.totalorder %s117, %s119
      %p123 = scmp.eq.s32.totalorder %s20, 0
      %p124 = por %p122, %p123
      %p125 = scmp.ne.s32.totalorder %s117, %s119
      %p126 = scmp.eq.s32.totalorder %s25, 1
      %p127 = por %p125, %p126
      %p128 = scmp.ne.s32.totalorder %s119, %s120
      %p129 = scmp.eq.s32.totalorder %s25, 0
      %p130 = por %p128, %p129
      %p131 = scmp.ne.s32.totalorder %s119, %s120
      %p132 = scmp.eq.s32.totalorder %s26, 1
      %p133 = por %p131, %p132
      %p135 = scmp.ne.s32.totalorder %s120, %s134
      %p136 = scmp.eq.s32.totalorder %s26, 0
      %p137 = por %p135, %p136
      %s139 = sadd.s32 %s138, 1
      %p142 = scmp.eq.s32.totalorder %s20, 1
      %p143 = scmp.ne.s32.totalorder %s138, %s140
      %p144 = scmp.eq.s32.totalorder %s20, 0
      %p145 = por %p143, %p144
      %p146 = scmp.ne.s32.totalorder %s138, %s140
      %p147 = scmp.eq.s32.totalorder %s25, 1
      %p148 = por %p146, %p147
      %p149 = scmp.ne.s32.totalorder %s140, %s141
      %p150 = scmp.eq.s32.totalorder %s25, 0
      %p151 = por %p149, %p150
      %p152 = scmp.ne.s32.totalorder %s140, %s141
      %p153 = scmp.eq.s32.totalorder %s26, 1
      %p154 = por %p152, %p153
      %p156 = scmp.ne.s32.totalorder %s141, %s155
      %p157 = scmp.eq.s32.totalorder %s26, 0
      %p158 = por %p156, %p157
      %s160 = sadd.s32 %s159, 1
      %p163 = scmp.eq.s32.totalorder %s20, 1
      %p164 = scmp.ne.s32.totalorder %s159, %s161
      %p165 = scmp.eq.s32.totalorder %s20, 0
      %p166 = por %p164, %p165
      %p167 = scmp.ne.s32.totalorder %s159, %s161
      %p168 = scmp.eq.s32.totalorder %s25, 1
      %p169 = por %p167, %p168
      %p170 = scmp.ne.s32.totalorder %s161, %s162
      %p171 = scmp.eq.s32.totalorder %s25, 0
      %p172 = por %p170, %p171
      %p173 = scmp.ne.s32.totalorder %s161, %s162
      %p174 = scmp.eq.s32.totalorder %s26, 1
      %p175 = por %p173, %p174
      %p177 = scmp.ne.s32.totalorder %s162, %s176
      %p178 = scmp.eq.s32.totalorder %s26, 0
      %p179 = por %p177, %p178
      %s180 = ssub.s32 %s20, %s27
      %p181 = scmp.eq.s32.totalorder %s180, 0
      %s183 = sadd.s32 %s182, 1
      %s184 = scalar_select %p181, %s182, %s183
      %p187 = pneg %p181
      %p188 = scmp.eq.s32.totalorder %s20, 1
      %p189 = por %p187, %p188
      %p190 = scmp.ne.s32.totalorder %s182, %s185
      %p191 = scmp.eq.s32.totalorder %s20, 0
      %p192 = por %p190, %p191
      %p193 = scmp.ne.s32.totalorder %s182, %s185
      %p194 = scmp.eq.s32.totalorder %s25, 1
      %p195 = por %p193, %p194
      %p196 = scmp.ne.s32.totalorder %s185, %s186
      %p197 = scmp.eq.s32.totalorder %s25, 0
      %p198 = por %p196, %p197
      %p199 = scmp.ne.s32.totalorder %s185, %s186
      %p200 = scmp.eq.s32.totalorder %s26, 1
      %p201 = por %p199, %p200
      %p203 = scmp.ne.s32.totalorder %s186, %s202
      %p204 = scmp.eq.s32.totalorder %s26, 0
      %p205 = por %p203, %p204
      %p206 = scmp.le.s32.totalorder 1, %s20
      %p207 = scmp.lt.s32.totalorder %s20, 3
      %p208 = pnand %p206, %p207
      %p209 = pneg %p208
      // Predicated region
      $region9: #{tpu_custom_call.1} parent=5 // pred_check
        _
      $region10: #{tpu_custom_call.1} parent=5 // pred_check_branch
        %211 = sbr.rel (%p208) target = $region12
      $region11: #{tpu_custom_call.1} parent=5 // pred_region
        %s212 = ssub.s32 %s20, 1
        // Predicated region
        $region13: #{tpu_custom_call.1} parent=11 // pred_check
          %p213 = pneg %p67
        $region14: #{tpu_custom_call.1} parent=11 // pred_check_branch
          %215 = sbr.rel (%p213) target = $region16
        $region15: #{tpu_custom_call.1} parent=11 // pred_region
          _
        $region16: #{tpu_custom_call.1} parent=11 // pred_fallthru
          _
        // Predicated region
        $region17: #{tpu_custom_call.1} parent=11 // pred_check
          %p216 = pneg %p88
        $region18: #{tpu_custom_call.1} parent=11 // pred_check_branch
          %218 = sbr.rel (%p216) target = $region20
        $region19: #{tpu_custom_call.1} parent=11 // pred_region
          _
        $region20: #{tpu_custom_call.1} parent=11 // pred_fallthru
          _
        // Predicated region
        $region21: #{tpu_custom_call.1} parent=11 // pred_check
          %p219 = pneg %p109
        $region22: #{tpu_custom_call.1} parent=11 // pred_check_branch
          %221 = sbr.rel (%p219) target = $region24
        $region23: #{tpu_custom_call.1} parent=11 // pred_region
          %s223 = ssub.s32 256, 256
          %224 = vsyncadd [#allocation6], %s223
          %s225 = sshll.u32 [#allocation5], 4
          %s226 = int_to_ptr.vmem [resolvable:$true] %s225
          %231 = dma.hbm_to_vmem [thread:$0]  %s3, 256, %s226, [#allocation6], 64, 64, 4
        $region24: #{tpu_custom_call.1} parent=11 // pred_fallthru
          _
        // Predicated region
        $region25: #{tpu_custom_call.1} parent=11 // pred_check
          %p232 = pneg %p130
        $region26: #{tpu_custom_call.1} parent=11 // pred_check_branch
          %234 = sbr.rel (%p232) target = $region28
        $region27: #{tpu_custom_call.1} parent=11 // pred_region
          %s236 = ssub.s32 16, 16
          %237 = vsyncadd [#allocation6], %s236
          %s239 = sshll.u32 [#allocation7], 4
          %s240 = int_to_ptr.vmem [resolvable:$true] %s239
          %242 = dma.hbm_to_vmem [thread:$0]  %s4, 16, %s240, [#allocation6]
        $region28: #{tpu_custom_call.1} parent=11 // pred_fallthru
          _
        // Predicated region
        $region29: #{tpu_custom_call.1} parent=11 // pred_check
          %p243 = pneg %p151
        $region30: #{tpu_custom_call.1} parent=11 // pred_check_branch
          %245 = sbr.rel (%p243) target = $region32
        $region31: #{tpu_custom_call.1} parent=11 // pred_region
          _
        $region32: #{tpu_custom_call.1} parent=11 // pred_fallthru
          _
        // Predicated region
        $region33: #{tpu_custom_call.1} parent=11 // pred_check
          %p246 = pneg %p172
        $region34: #{tpu_custom_call.1} parent=11 // pred_check_branch
          %248 = sbr.rel (%p246) target = $region36
        $region35: #{tpu_custom_call.1} parent=11 // pred_region
          _
        $region36: #{tpu_custom_call.1} parent=11 // pred_fallthru
          _
      $region12: #{tpu_custom_call.1} parent=5 // pred_fallthru
        _
      %p249 = scmp.lt.s32.totalorder %s20, 2
      // Predicated region
      $region37: #{tpu_custom_call.1} parent=5 // pred_check
        %p250 = pneg %p249
      $region38: #{tpu_custom_call.1} parent=5 // pred_check_branch
        %252 = sbr.rel (%p250) target = $region40
      $region39: #{tpu_custom_call.1} parent=5 // pred_region
        // Predicated region
        $region41: #{tpu_custom_call.1} parent=39 // pred_check
          %p253 = pneg %p40
        $region42: #{tpu_custom_call.1} parent=39 // pred_check_branch
          %255 = sbr.rel (%p253) target = $region44
        $region43: #{tpu_custom_call.1} parent=39 // pred_region
          %s256 = sand.u32 %s30, 1
          %s257 = scalar_lea.sflag [#allocation3], %s256
          %s258 = sand.u32 %s30, 1
          %s259 = smul.addr %s258, 8
          %s260 = scalar_lea.vmem [#allocation2], %s259
          %s262 = ssub.s32 128, 128
          %263 = vsyncadd %s257, %s262
          %s264 = smul.addr %s20, 128
          %s265 = scalar_lea.hbm %s0, %s264
          %s267 = sshll.u32 %s260, 4
          %s268 = int_to_ptr.vmem [resolvable:$true] %s267
          %270 = dma.hbm_to_vmem [thread:$0]  %s265, 128, %s268, %s257
        $region44: #{tpu_custom_call.1} parent=39 // pred_fallthru
          _
      $region40: #{tpu_custom_call.1} parent=5 // pred_fallthru
        _
      %p271 = scmp.le.s32.totalorder 1, %s20
      %p272 = scmp.lt.s32.totalorder %s20, 3
      %p273 = pnand %p271, %p272
      %p274 = pneg %p273
      // Predicated region
      $region45: #{tpu_custom_call.1} parent=5 // pred_check
        _
      $region46: #{tpu_custom_call.1} parent=5 // pred_check_branch
        %276 = sbr.rel (%p273) target = $region48
      $region47: #{tpu_custom_call.1} parent=5 // pred_region
        %s277 = ssub.s32 %s20, 1
        %s278 = sand.u32 %s33, 1
        %s279 = scalar_lea.sflag [#allocation3], %s278
        %s280 = sand.u32 %s33, 1
        %s281 = smul.addr %s280, 8
        %s282 = scalar_lea.vmem [#allocation2], %s281
        // Predicated region
        $region49: #{tpu_custom_call.1} parent=47 // pred_check
          %p283 = pneg %p46
        $region50: #{tpu_custom_call.1} parent=47 // pred_check_branch
          %285 = sbr.rel (%p283) target = $region52
        $region51: #{tpu_custom_call.1} parent=47 // pred_region
          %286 = dma.done %s279, 128
        $region52: #{tpu_custom_call.1} parent=47 // pred_fallthru
          _
        // Predicated region
        $region53: #{tpu_custom_call.1} parent=47 // pred_check
          %p287 = pneg %p109
        $region54: #{tpu_custom_call.1} parent=47 // pred_check_branch
          %289 = sbr.rel (%p287) target = $region56
        $region55: #{tpu_custom_call.1} parent=47 // pred_region
          %290 = dma.done [#allocation6], 256
        $region56: #{tpu_custom_call.1} parent=47 // pred_fallthru
          _
        // Predicated region
        $region57: #{tpu_custom_call.1} parent=47 // pred_check
          %p291 = pneg %p130
        $region58: #{tpu_custom_call.1} parent=47 // pred_check_branch
          %293 = sbr.rel (%p291) target = $region60
        $region59: #{tpu_custom_call.1} parent=47 // pred_region
          %294 = dma.done [#allocation6], 16
        $region60: #{tpu_custom_call.1} parent=47 // pred_fallthru
          _
        %s295 = sand.u32 %s33, 1
        %s296 = scalar_lea.sflag [#allocation3], %s295
        %s297 = sand.u32 %s33, 1
        %s298 = smul.addr %s297, 8
        %s299 = scalar_lea.vmem [#allocation2], %s298
        %p300 = pneg %p46
        %p301 = pneg %p43
        %p302 = pneg %p67
        %p303 = pneg %p64
        %p304 = pneg %p88
        %p305 = pneg %p85
        %p306 = pneg %p109
        %p307 = pneg %p106
        %p308 = pneg %p130
        %p309 = pneg %p127
        %p310 = pneg %p151
        %p311 = pneg %p148
        %p312 = pneg %p172
        %p313 = pneg %p169
        %p314 = pneg %p198
        %p315 = pneg %p195
        %s316 = sand.u32 %s185, 1
        %s317 = scalar_lea.sflag [#allocation4], %s316
        %s318 = sand.u32 %s185, 1
        %s319 = smul.addr %s318, 8
        %s320 = scalar_lea.vmem [#allocation8], %s319
        %v322 = vld [vmem:[%s282] sm:$0xff]
        %vm323 = vcmask 261120
        %v324 = vsel %vm323, %v322, 0.0
        %325 = vadd.xlane.f32.xlu0 %v324
        %v326 = vpop.xlane.xlu0 %325
        %v327 = vrcp.pop 32.0
        %v328 = vmul.f32 %v326, %v327
        %v329 = vsub.f32 %v322, %v328
        %v330 = vmul.f32 %v329, %v329
        %v331 = vsel %vm323, %v330, 0.0
        %332 = vadd.xlane.f32.xlu0 %v331
        %v333 = vpop.xlane.xlu0 %332
        %v334 = vmul.f32 %v333, %v327
        %v335 = vadd.f32 %v334, 1e-05
        %v336 = vrsqrt.pop %v335
        %v337 = vmul.f32 %v329, %v336
        %v338 = vld [vmem:[%s1] sm:$0x1]
        %v340 = vlaneseq
        %v341 = vshrl.u32 %v340, 7
        %v342 = vsub.s32 0, %v341
        %v343 = vrot.slane %v338, %v342
        %v345 = vmul.f32 %v337, %v343
        %v346 = vld [vmem:[%s2] sm:$0x1]
        %v348 = vlaneseq
        %v349 = vshrl.u32 %v348, 7
        %v350 = vsub.s32 0, %v349
        %v351 = vrot.slane %v346, %v350
        %v353 = vadd.f32 %v345, %v351
        %v354 = vpack.c.bf16 %v353, %v353
        %v355 = vld [vmem:[#allocation5] sm:$0xf]
        %v356 = vld [vmem:[#allocation5 + $0x4] sm:$0xf]
        %v357 = vld [vmem:[#allocation5 + $0x8] sm:$0xf]
        %v358 = vld [vmem:[#allocation5 + $0xc] sm:$0xf]
        %v359 = vld [vmem:[#allocation7] sm:$0x1]
        %v361 = vlaneseq
        %v362 = vshrl.u32 %v361, 7
        %v363 = vsub.s32 0, %v362
        %v364 = vrot.slane %v359, %v363
        %v370 = vunpack.c.l.b16 %v355
        %v371 = vunpack.c.l.b16 %v356
        %v372 = vunpack.c.l.b16 %v357
        %v373 = vunpack.c.l.b16 %v358
        %v374 = vpack.c.b16 %v371, %v370
        %v375 = vpack.c.b16 %v373, %v372
        %v379 = vsel %vm323, %v354, 0
        %381 = vmatprep.subr.bf16.mxu0 0
        %382 = vmatpush1.bf16.msra.mxu0 %v374
        %383 = vmatprep.subr.bf16.mxu0 0
        %384 = vmatpush1.bf16.msra.mxu0 %v375
        %385 = vmatprep.subr.bf16.mxu0 0
        %386 = vmatpush1.bf16.msra.mxu0 0
        %387 = vmatprep.subr.bf16.mxu0 0
        %388 = vmatpush1.bf16.msra.mxu0 0
        %389 = vmatprep.subr.bf16.mxu0 0
        %390 = vmatpush1.bf16.msra.mxu0 0
        %391 = vmatprep.subr.bf16.mxu0 0
        %392 = vmatpush1.bf16.msra.mxu0 0
        %393 = vmatprep.subr.bf16.mxu0 0
        %394 = vmatpush1.bf16.msra.mxu0 0
        %395 = vmatprep.subr.bf16.mxu0 0
        %396 = vmatpush1.bf16.msra.mxu0 0
        %397 = vmatprep.subr.bf16.mxu0 0
        %398 = vmatpush1.bf16.msra.mxu0 0
        %399 = vmatprep.subr.bf16.mxu0 0
        %400 = vmatpush1.bf16.msra.mxu0 0
        %401 = vmatprep.subr.bf16.mxu0 0
        %402 = vmatpush1.bf16.msra.mxu0 0
        %403 = vmatprep.subr.bf16.mxu0 0
        %404 = vmatpush1.bf16.msra.mxu0 0
        %405 = vmatprep.subr.bf16.mxu0 0
        %406 = vmatpush1.bf16.msra.mxu0 0
        %407 = vmatprep.subr.bf16.mxu0 0
        %408 = vmatpush1.bf16.msra.mxu0 0
        %409 = vmatprep.subr.bf16.mxu0 0
        %410 = vmatpush1.bf16.msra.mxu0 0
        %411 = vmatprep.subr.bf16.mxu0 0
        %412 = vmatpush1.bf16.msra.mxu0 0
        %413 = vmatprep.mubr.bf16.mxu0 0
        %414 = vmatmul.mubr.bf16.gmra.mrb[0].mxu0 %v379
        %v415 = vpop.f32.mrb[0].mxu0
        %v416 = vadd.f32 %v364, %v415
        %v417 = vpop.f32.mrb[0].mxu0
        %v418 = vpop.f32.mrb[0].mxu0
        %v419 = vpop.f32.mrb[0].mxu0
        %420 = vdwg.mxu0
        %v421 = vpack.c.bf16 %v416, %v416
        %423 = vrot.lane.b32.xlu0 %v421, 96
        %v424 = vpop.permute.xlu0 %423
        %vm425 = vcmask 64512
        %v427 = vsel %vm425, %v421, 0
        %v430 = vsel %vm425, %v424, 0
        %432 = vmatprep.subr.bf16.mxu0 0
        %433 = vmatpush1.bf16.xpose.msra.mxu0 %v430
        %434 = vmatprep.subr.bf16.mxu0 0
        %435 = vmatpush1.bf16.xpose.msra.mxu0 0
        %436 = vmatprep.subr.bf16.mxu0 0
        %437 = vmatpush1.bf16.xpose.msra.mxu0 0
        %438 = vmatprep.subr.bf16.mxu0 0
        %439 = vmatpush1.bf16.xpose.msra.mxu0 0
        %440 = vmatprep.subr.bf16.mxu0 0
        %441 = vmatpush1.bf16.xpose.msra.mxu0 0
        %442 = vmatprep.subr.bf16.mxu0 0
        %443 = vmatpush1.bf16.xpose.msra.mxu0 0
        %444 = vmatprep.subr.bf16.mxu0 0
        %445 = vmatpush1.bf16.xpose.msra.mxu0 0
        %446 = vmatprep.subr.bf16.mxu0 0
        %447 = vmatpush1.bf16.xpose.msra.mxu0 0
        %448 = vmatprep.subr.bf16.mxu0 0
        %449 = vmatpush1.bf16.xpose.msra.mxu0 0
        %450 = vmatprep.subr.bf16.mxu0 0
        %451 = vmatpush1.bf16.xpose.msra.mxu0 0
        %452 = vmatprep.subr.bf16.mxu0 0
        %453 = vmatpush1.bf16.xpose.msra.mxu0 0
        %454 = vmatprep.subr.bf16.mxu0 0
        %455 = vmatpush1.bf16.xpose.msra.mxu0 0
        %456 = vmatprep.subr.bf16.mxu0 0
        %457 = vmatpush1.bf16.xpose.msra.mxu0 0
        %458 = vmatprep.subr.bf16.mxu0 0
        %459 = vmatpush1.bf16.xpose.msra.mxu0 0
        %460 = vmatprep.subr.bf16.mxu0 0
        %461 = vmatpush1.bf16.xpose.msra.mxu0 0
        %462 = vmatprep.subr.bf16.mxu0 0
        %463 = vmatpush1.bf16.xpose.msra.mxu0 0
        %464 = vmatprep.mubr.bf16.mxu0 0
        %465 = vmatmul.mubr.bf16.gmra.mrb[0].mxu0 %v427
        %v466 = vpop.f32.mrb[0].mxu0
        %v467 = vadd.f32 0.0, %v466
        %v468 = vpop.f32.mrb[0].mxu0
        %v469 = vpop.f32.mrb[0].mxu0
        %v470 = vpop.f32.mrb[0].mxu0
        %471 = vdwg.mxu0
        %v472 = vsel %vm425, %v467, -inf
        %473 = vmax.xlane.f32.xlu0 %v472
        %v474 = vpop.xlane.xlu0 %473
        %v475 = vsub.f32 %v467, %v474
        %v476 = vmul.f32 %v475, 1.442695
        %v477 = vpow.pop %v476
        %v478 = vsel %vm425, %v477, 0.0
        %479 = vadd.xlane.f32.xlu0 %v478
        %v480 = vpop.xlane.xlu0 %479
        %v481 = vrcp.pop %v480
        %v482 = vmul.f32 %v477, %v481
        %v483 = vpack.c.bf16 %v482, %v482
        %484 = vrot.lane.b32.xlu0 %v421, 64
        %v485 = vpop.permute.xlu0 %484
        %v487 = vsel %vm425, %v483, 0
        %vm489 = vcmask 1043456
        %v491 = vsel %vm489, %v485, 0
        %493 = vmatprep.subr.bf16.mxu0 0
        %494 = vmatpush1.bf16.msra.mxu0 %v491
        %495 = vmatprep.subr.bf16.mxu0 0
        %496 = vmatpush1.bf16.msra.mxu0 0
        %497 = vmatprep.subr.bf16.mxu0 0
        %498 = vmatpush1.bf16.msra.mxu0 0
        %499 = vmatprep.subr.bf16.mxu0 0
        %500 = vmatpush1.bf16.msra.mxu0 0
        %501 = vmatprep.subr.bf16.mxu0 0
        %502 = vmatpush1.bf16.msra.mxu0 0
        %503 = vmatprep.subr.bf16.mxu0 0
        %504 = vmatpush1.bf16.msra.mxu0 0
        %505 = vmatprep.subr.bf16.mxu0 0
        %506 = vmatpush1.bf16.msra.mxu0 0
        %507 = vmatprep.subr.bf16.mxu0 0
        %508 = vmatpush1.bf16.msra.mxu0 0
        %509 = vmatprep.subr.bf16.mxu0 0
        %510 = vmatpush1.bf16.msra.mxu0 0
        %511 = vmatprep.subr.bf16.mxu0 0
        %512 = vmatpush1.bf16.msra.mxu0 0
        %513 = vmatprep.subr.bf16.mxu0 0
        %514 = vmatpush1.bf16.msra.mxu0 0
        %515 = vmatprep.subr.bf16.mxu0 0
        %516 = vmatpush1.bf16.msra.mxu0 0
        %517 = vmatprep.subr.bf16.mxu0 0
        %518 = vmatpush1.bf16.msra.mxu0 0
        %519 = vmatprep.subr.bf16.mxu0 0
        %520 = vmatpush1.bf16.msra.mxu0 0
        %521 = vmatprep.subr.bf16.mxu0 0
        %522 = vmatpush1.bf16.msra.mxu0 0
        %523 = vmatprep.subr.bf16.mxu0 0
        %524 = vmatpush1.bf16.msra.mxu0 0
        %525 = vmatprep.mubr.bf16.mxu0 0
        %526 = vmatmul.mubr.bf16.gmra.mrb[0].mxu0 %v487
        %v527 = vpop.f32.mrb[0].mxu0
        %v528 = vadd.f32 0.0, %v527
        %v529 = vpop.f32.mrb[0].mxu0
        %v530 = vpop.f32.mrb[0].mxu0
        %v531 = vpop.f32.mrb[0].mxu0
        %532 = vdwg.mxu0
        %533 = vrot.lane.b32.xlu0 %v421, 120
        %v534 = vpop.permute.xlu0 %533
        %535 = vrot.lane.b32.xlu0 %v421, 88
        %v536 = vpop.permute.xlu0 %535
        %v538 = vsel %vm425, %v534, 0
        %v541 = vsel %vm425, %v536, 0
        %543 = vmatprep.subr.bf16.mxu0 0
        %544 = vmatpush1.bf16.xpose.msra.mxu0 %v541
        %545 = vmatprep.subr.bf16.mxu0 0
        %546 = vmatpush1.bf16.xpose.msra.mxu0 0
        %547 = vmatprep.subr.bf16.mxu0 0
        %548 = vmatpush1.bf16.xpose.msra.mxu0 0
        %549 = vmatprep.subr.bf16.mxu0 0
        %550 = vmatpush1.bf16.xpose.msra.mxu0 0
        %551 = vmatprep.subr.bf16.mxu0 0
        %552 = vmatpush1.bf16.xpose.msra.mxu0 0
        %553 = vmatprep.subr.bf16.mxu0 0
        %554 = vmatpush1.bf16.xpose.msra.mxu0 0
        %555 = vmatprep.subr.bf16.mxu0 0
        %556 = vmatpush1.bf16.xpose.msra.mxu0 0
        %557 = vmatprep.subr.bf16.mxu0 0
        %558 = vmatpush1.bf16.xpose.msra.mxu0 0
        %559 = vmatprep.subr.bf16.mxu0 0
        %560 = vmatpush1.bf16.xpose.msra.mxu0 0
        %561 = vmatprep.subr.bf16.mxu0 0
        %562 = vmatpush1.bf16.xpose.msra.mxu0 0
        %563 = vmatprep.subr.bf16.mxu0 0
        %564 = vmatpush1.bf16.xpose.msra.mxu0 0
        %565 = vmatprep.subr.bf16.mxu0 0
        %566 = vmatpush1.bf16.xpose.msra.mxu0 0
        %567 = vmatprep.subr.bf16.mxu0 0
        %568 = vmatpush1.bf16.xpose.msra.mxu0 0
        %569 = vmatprep.subr.bf16.mxu0 0
        %570 = vmatpush1.bf16.xpose.msra.mxu0 0
        %571 = vmatprep.subr.bf16.mxu0 0
        %572 = vmatpush1.bf16.xpose.msra.mxu0 0
        %573 = vmatprep.subr.bf16.mxu0 0
        %574 = vmatpush1.bf16.xpose.msra.mxu0 0
        %575 = vmatprep.mubr.bf16.mxu0 0
        %576 = vmatmul.mubr.bf16.gmra.mrb[0].mxu0 %v538
        %v577 = vpop.f32.mrb[0].mxu0
        %v578 = vadd.f32 0.0, %v577
        %v579 = vpop.f32.mrb[0].mxu0
        %v580 = vpop.f32.mrb[0].mxu0
        %v581 = vpop.f32.mrb[0].mxu0
        %582 = vdwg.mxu0
        %v583 = vsel %vm425, %v578, -inf
        %584 = vmax.xlane.f32.xlu0 %v583
        %v585 = vpop.xlane.xlu0 %584
        %v586 = vsub.f32 %v578, %v585
        %v587 = vmul.f32 %v586, 1.442695
        %v588 = vpow.pop %v587
        %v589 = vsel %vm425, %v588, 0.0
        %590 = vadd.xlane.f32.xlu0 %v589
        %v591 = vpop.xlane.xlu0 %590
        %v592 = vrcp.pop %v591
        %v593 = vmul.f32 %v588, %v592
        %v594 = vpack.c.bf16 %v593, %v593
        %595 = vrot.lane.b32.xlu0 %v421, 56
        %v596 = vpop.permute.xlu0 %595
        %v598 = vsel %vm425, %v594, 0
        %v601 = vsel %vm489, %v596, 0
        %603 = vmatprep.subr.bf16.mxu0 0
        %604 = vmatpush1.bf16.msra.mxu0 %v601
        %605 = vmatprep.subr.bf16.mxu0 0
        %606 = vmatpush1.bf16.msra.mxu0 0
        %607 = vmatprep.subr.bf16.mxu0 0
        %608 = vmatpush1.bf16.msra.mxu0 0
        %609 = vmatprep.subr.bf16.mxu0 0
        %610 = vmatpush1.bf16.msra.mxu0 0
        %611 = vmatprep.subr.bf16.mxu0 0
        %612 = vmatpush1.bf16.msra.mxu0 0
        %613 = vmatprep.subr.bf16.mxu0 0
        %614 = vmatpush1.bf16.msra.mxu0 0
        %615 = vmatprep.subr.bf16.mxu0 0
        %616 = vmatpush1.bf16.msra.mxu0 0
        %617 = vmatprep.subr.bf16.mxu0 0
        %618 = vmatpush1.bf16.msra.mxu0 0
        %619 = vmatprep.subr.bf16.mxu0 0
        %620 = vmatpush1.bf16.msra.mxu0 0
        %621 = vmatprep.subr.bf16.mxu0 0
        %622 = vmatpush1.bf16.msra.mxu0 0
        %623 = vmatprep.subr.bf16.mxu0 0
        %624 = vmatpush1.bf16.msra.mxu0 0
        %625 = vmatprep.subr.bf16.mxu0 0
        %626 = vmatpush1.bf16.msra.mxu0 0
        %627 = vmatprep.subr.bf16.mxu0 0
        %628 = vmatpush1.bf16.msra.mxu0 0
        %629 = vmatprep.subr.bf16.mxu0 0
        %630 = vmatpush1.bf16.msra.mxu0 0
        %631 = vmatprep.subr.bf16.mxu0 0
        %632 = vmatpush1.bf16.msra.mxu0 0
        %633 = vmatprep.subr.bf16.mxu0 0
        %634 = vmatpush1.bf16.msra.mxu0 0
        %635 = vmatprep.mubr.bf16.mxu0 0
        %636 = vmatmul.mubr.bf16.gmra.mrb[0].mxu0 %v598
        %v637 = vpop.f32.mrb[0].mxu0
        %v638 = vadd.f32 0.0, %v637
        %v639 = vpop.f32.mrb[0].mxu0
        %v640 = vpop.f32.mrb[0].mxu0
        %v641 = vpop.f32.mrb[0].mxu0
        %642 = vdwg.mxu0
        %643 = vrot.lane.b32.xlu0 %v421, 112
        %v644 = vpop.permute.xlu0 %643
        %645 = vrot.lane.b32.xlu0 %v421, 80
        %v646 = vpop.permute.xlu0 %645
        %v648 = vsel %vm425, %v644, 0
        %v651 = vsel %vm425, %v646, 0
        %653 = vmatprep.subr.bf16.mxu0 0
        %654 = vmatpush1.bf16.xpose.msra.mxu0 %v651
        %655 = vmatprep.subr.bf16.mxu0 0
        %656 = vmatpush1.bf16.xpose.msra.mxu0 0
        %657 = vmatprep.subr.bf16.mxu0 0
        %658 = vmatpush1.bf16.xpose.msra.mxu0 0
        %659 = vmatprep.subr.bf16.mxu0 0
        %660 = vmatpush1.bf16.xpose.msra.mxu0 0
        %661 = vmatprep.subr.bf16.mxu0 0
        %662 = vmatpush1.bf16.xpose.msra.mxu0 0
        %663 = vmatprep.subr.bf16.mxu0 0
        %664 = vmatpush1.bf16.xpose.msra.mxu0 0
        %665 = vmatprep.subr.bf16.mxu0 0
        %666 = vmatpush1.bf16.xpose.msra.mxu0 0
        %667 = vmatprep.subr.bf16.mxu0 0
        %668 = vmatpush1.bf16.xpose.msra.mxu0 0
        %669 = vmatprep.subr.bf16.mxu0 0
        %670 = vmatpush1.bf16.xpose.msra.mxu0 0
        %671 = vmatprep.subr.bf16.mxu0 0
        %672 = vmatpush1.bf16.xpose.msra.mxu0 0
        %673 = vmatprep.subr.bf16.mxu0 0
        %674 = vmatpush1.bf16.xpose.msra.mxu0 0
        %675 = vmatprep.subr.bf16.mxu0 0
        %676 = vmatpush1.bf16.xpose.msra.mxu0 0
        %677 = vmatprep.subr.bf16.mxu0 0
        %678 = vmatpush1.bf16.xpose.msra.mxu0 0
        %679 = vmatprep.subr.bf16.mxu0 0
        %680 = vmatpush1.bf16.xpose.msra.mxu0 0
        %681 = vmatprep.subr.bf16.mxu0 0
        %682 = vmatpush1.bf16.xpose.msra.mxu0 0
        %683 = vmatprep.subr.bf16.mxu0 0
        %684 = vmatpush1.bf16.xpose.msra.mxu0 0
        %685 = vmatprep.mubr.bf16.mxu0 0
        %686 = vmatmul.mubr.bf16.gmra.mrb[0].mxu0 %v648
        %v687 = vpop.f32.mrb[0].mxu0
        %v688 = vadd.f32 0.0, %v687
        %v689 = vpop.f32.mrb[0].mxu0
        %v690 = vpop.f32.mrb[0].mxu0
        %v691 = vpop.f32.mrb[0].mxu0
        %692 = vdwg.mxu0
        %v693 = vsel %vm425, %v688, -inf
        %694 = vmax.xlane.f32.xlu0 %v693
        %v695 = vpop.xlane.xlu0 %694
        %v696 = vsub.f32 %v688, %v695
        %v697 = vmul.f32 %v696, 1.442695
        %v698 = vpow.pop %v697
        %v699 = vsel %vm425, %v698, 0.0
        %700 = vadd.xlane.f32.xlu0 %v699
        %v701 = vpop.xlane.xlu0 %700
        %v702 = vrcp.pop %v701
        %v703 = vmul.f32 %v698, %v702
        %v704 = vpack.c.bf16 %v703, %v703
        %705 = vrot.lane.b32.xlu0 %v421, 48
        %v706 = vpop.permute.xlu0 %705
        %v708 = vsel %vm425, %v704, 0
        %v711 = vsel %vm489, %v706, 0
        %713 = vmatprep.subr.bf16.mxu0 0
        %714 = vmatpush1.bf16.msra.mxu0 %v711
        %715 = vmatprep.subr.bf16.mxu0 0
        %716 = vmatpush1.bf16.msra.mxu0 0
        %717 = vmatprep.subr.bf16.mxu0 0
        %718 = vmatpush1.bf16.msra.mxu0 0
        %719 = vmatprep.subr.bf16.mxu0 0
        %720 = vmatpush1.bf16.msra.mxu0 0
        %721 = vmatprep.subr.bf16.mxu0 0
        %722 = vmatpush1.bf16.msra.mxu0 0
        %723 = vmatprep.subr.bf16.mxu0 0
        %724 = vmatpush1.bf16.msra.mxu0 0
        %725 = vmatprep.subr.bf16.mxu0 0
        %726 = vmatpush1.bf16.msra.mxu0 0
        %727 = vmatprep.subr.bf16.mxu0 0
        %728 = vmatpush1.bf16.msra.mxu0 0
        %729 = vmatprep.subr.bf16.mxu0 0
        %730 = vmatpush1.bf16.msra.mxu0 0
        %731 = vmatprep.subr.bf16.mxu0 0
        %732 = vmatpush1.bf16.msra.mxu0 0
        %733 = vmatprep.subr.bf16.mxu0 0
        %734 = vmatpush1.bf16.msra.mxu0 0
        %735 = vmatprep.subr.bf16.mxu0 0
        %736 = vmatpush1.bf16.msra.mxu0 0
        %737 = vmatprep.subr.bf16.mxu0 0
        %738 = vmatpush1.bf16.msra.mxu0 0
        %739 = vmatprep.subr.bf16.mxu0 0
        %740 = vmatpush1.bf16.msra.mxu0 0
        %741 = vmatprep.subr.bf16.mxu0 0
        %742 = vmatpush1.bf16.msra.mxu0 0
        %743 = vmatprep.subr.bf16.mxu0 0
        %744 = vmatpush1.bf16.msra.mxu0 0
        %745 = vmatprep.mubr.bf16.mxu0 0
        %746 = vmatmul.mubr.bf16.gmra.mrb[0].mxu0 %v708
        %v747 = vpop.f32.mrb[0].mxu0
        %v748 = vadd.f32 0.0, %v747
        %v749 = vpop.f32.mrb[0].mxu0
        %v750 = vpop.f32.mrb[0].mxu0
        %v751 = vpop.f32.mrb[0].mxu0
        %752 = vdwg.mxu0
        %753 = vrot.lane.b32.xlu0 %v421, 104
        %v754 = vpop.permute.xlu0 %753
        %755 = vrot.lane.b32.xlu0 %v421, 72
        %v756 = vpop.permute.xlu0 %755
        %v758 = vsel %vm425, %v754, 0
        %v761 = vsel %vm425, %v756, 0
        %763 = vmatprep.subr.bf16.mxu0 0
        %764 = vmatpush1.bf16.xpose.msra.mxu0 %v761
        %765 = vmatprep.subr.bf16.mxu0 0
        %766 = vmatpush1.bf16.xpose.msra.mxu0 0
        %767 = vmatprep.subr.bf16.mxu0 0
        %768 = vmatpush1.bf16.xpose.msra.mxu0 0
        %769 = vmatprep.subr.bf16.mxu0 0
        %770 = vmatpush1.bf16.xpose.msra.mxu0 0
        %771 = vmatprep.subr.bf16.mxu0 0
        %772 = vmatpush1.bf16.xpose.msra.mxu0 0
        %773 = vmatprep.subr.bf16.mxu0 0
        %774 = vmatpush1.bf16.xpose.msra.mxu0 0
        %775 = vmatprep.subr.bf16.mxu0 0
        %776 = vmatpush1.bf16.xpose.msra.mxu0 0
        %777 = vmatprep.subr.bf16.mxu0 0
        %778 = vmatpush1.bf16.xpose.msra.mxu0 0
        %779 = vmatprep.subr.bf16.mxu0 0
        %780 = vmatpush1.bf16.xpose.msra.mxu0 0
        %781 = vmatprep.subr.bf16.mxu0 0
        %782 = vmatpush1.bf16.xpose.msra.mxu0 0
        %783 = vmatprep.subr.bf16.mxu0 0
        %784 = vmatpush1.bf16.xpose.msra.mxu0 0
        %785 = vmatprep.subr.bf16.mxu0 0
        %786 = vmatpush1.bf16.xpose.msra.mxu0 0
        %787 = vmatprep.subr.bf16.mxu0 0
        %788 = vmatpush1.bf16.xpose.msra.mxu0 0
        %789 = vmatprep.subr.bf16.mxu0 0
        %790 = vmatpush1.bf16.xpose.msra.mxu0 0
        %791 = vmatprep.subr.bf16.mxu0 0
        %792 = vmatpush1.bf16.xpose.msra.mxu0 0
        %793 = vmatprep.subr.bf16.mxu0 0
        %794 = vmatpush1.bf16.xpose.msra.mxu0 0
        %795 = vmatprep.mubr.bf16.mxu0 0
        %796 = vmatmul.mubr.bf16.gmra.mrb[0].mxu0 %v758
        %v797 = vpop.f32.mrb[0].mxu0
        %v798 = vadd.f32 0.0, %v797
        %v799 = vpop.f32.mrb[0].mxu0
        %v800 = vpop.f32.mrb[0].mxu0
        %v801 = vpop.f32.mrb[0].mxu0
        %802 = vdwg.mxu0
        %v803 = vsel %vm425, %v798, -inf
        %804 = vmax.xlane.f32.xlu0 %v803
        %v805 = vpop.xlane.xlu0 %804
        %v806 = vsub.f32 %v798, %v805
        %v807 = vmul.f32 %v806, 1.442695
        %v808 = vpow.pop %v807
        %v809 = vsel %vm425, %v808, 0.0
        %810 = vadd.xlane.f32.xlu0 %v809
        %v811 = vpop.xlane.xlu0 %810
        %v812 = vrcp.pop %v811
        %v813 = vmul.f32 %v808, %v812
        %v814 = vpack.c.bf16 %v813, %v813
        %815 = vrot.lane.b32.xlu0 %v421, 40
        %v816 = vpop.permute.xlu0 %815
        %v818 = vsel %vm425, %v814, 0
        %v821 = vsel %vm489, %v816, 0
        %823 = vmatprep.subr.bf16.mxu0 0
        %824 = vmatpush1.bf16.msra.mxu0 %v821
        %825 = vmatprep.subr.bf16.mxu0 0
        %826 = vmatpush1.bf16.msra.mxu0 0
        %827 = vmatprep.subr.bf16.mxu0 0
        %828 = vmatpush1.bf16.msra.mxu0 0
        %829 = vmatprep.subr.bf16.mxu0 0
        %830 = vmatpush1.bf16.msra.mxu0 0
        %831 = vmatprep.subr.bf16.mxu0 0
        %832 = vmatpush1.bf16.msra.mxu0 0
        %833 = vmatprep.subr.bf16.mxu0 0
        %834 = vmatpush1.bf16.msra.mxu0 0
        %835 = vmatprep.subr.bf16.mxu0 0
        %836 = vmatpush1.bf16.msra.mxu0 0
        %837 = vmatprep.subr.bf16.mxu0 0
        %838 = vmatpush1.bf16.msra.mxu0 0
        %839 = vmatprep.subr.bf16.mxu0 0
        %840 = vmatpush1.bf16.msra.mxu0 0
        %841 = vmatprep.subr.bf16.mxu0 0
        %842 = vmatpush1.bf16.msra.mxu0 0
        %843 = vmatprep.subr.bf16.mxu0 0
        %844 = vmatpush1.bf16.msra.mxu0 0
        %845 = vmatprep.subr.bf16.mxu0 0
        %846 = vmatpush1.bf16.msra.mxu0 0
        %847 = vmatprep.subr.bf16.mxu0 0
        %848 = vmatpush1.bf16.msra.mxu0 0
        %849 = vmatprep.subr.bf16.mxu0 0
        %850 = vmatpush1.bf16.msra.mxu0 0
        %851 = vmatprep.subr.bf16.mxu0 0
        %852 = vmatpush1.bf16.msra.mxu0 0
        %853 = vmatprep.subr.bf16.mxu0 0
        %854 = vmatpush1.bf16.msra.mxu0 0
        %855 = vmatprep.mubr.bf16.mxu0 0
        %856 = vmatmul.mubr.bf16.gmra.mrb[0].mxu0 %v818
        %v857 = vpop.f32.mrb[0].mxu0
        %v858 = vadd.f32 0.0, %v857
        %v859 = vpop.f32.mrb[0].mxu0
        %v860 = vpop.f32.mrb[0].mxu0
        %v861 = vpop.f32.mrb[0].mxu0
        %862 = vdwg.mxu0
        %864 = vrot.lane.b32.xlu0 %v638, 8
        %v865 = vpop.permute.xlu0 %864
        %868 = vrot.lane.b32.xlu0 %v748, 16
        %v869 = vpop.permute.xlu0 %868
        %872 = vrot.lane.b32.xlu0 %v858, 24
        %v873 = vpop.permute.xlu0 %872
        %v875 = vsel %vm425, %v528, %v865
        %vm876 = vcmask 130048
        %v877 = vsel %vm876, %v875, %v869
        %vm878 = vcmask 195584
        %v879 = vsel %vm878, %v877, %v873
        %v880 = vpack.c.bf16 %v879, %v879
        %v881 = vld [vmem:[%s5] sm:$0xf]
        %v882 = vld [vmem:[%s5 + $0x4] sm:$0xf]
        %v883 = vld [vmem:[%s5 + $0x8] sm:$0xf]
        %v884 = vld [vmem:[%s5 + $0xc] sm:$0xf]
        %v885 = vld [vmem:[%s6] sm:$0x1]
        %v887 = vlaneseq
        %v888 = vshrl.u32 %v887, 7
        %v889 = vsub.s32 0, %v888
        %v890 = vrot.slane %v885, %v889
        %v896 = vunpack.c.l.b16 %v881
        %v897 = vunpack.c.l.b16 %v882
        %v898 = vunpack.c.l.b16 %v883
        %v899 = vunpack.c.l.b16 %v884
        %v900 = vpack.c.b16 %v897, %v896
        %v901 = vpack.c.b16 %v899, %v898
        %v905 = vsel %vm323, %v880, 0
        %907 = vmatprep.subr.bf16.mxu0 0
        %908 = vmatpush1.bf16.msra.mxu0 %v900
        %909 = vmatprep.subr.bf16.mxu0 0
        %910 = vmatpush1.bf16.msra.mxu0 %v901
        %911 = vmatprep.subr.bf16.mxu0 0
        %912 = vmatpush1.bf16.msra.mxu0 0
        %913 = vmatprep.subr.bf16.mxu0 0
        %914 = vmatpush1.bf16.msra.mxu0 0
        %915 = vmatprep.subr.bf16.mxu0 0
        %916 = vmatpush1.bf16.msra.mxu0 0
        %917 = vmatprep.subr.bf16.mxu0 0
        %918 = vmatpush1.bf16.msra.mxu0 0
        %919 = vmatprep.subr.bf16.mxu0 0
        %920 = vmatpush1.bf16.msra.mxu0 0
        %921 = vmatprep.subr.bf16.mxu0 0
        %922 = vmatpush1.bf16.msra.mxu0 0
        %923 = vmatprep.subr.bf16.mxu0 0
        %924 = vmatpush1.bf16.msra.mxu0 0
        %925 = vmatprep.subr.bf16.mxu0 0
        %926 = vmatpush1.bf16.msra.mxu0 0
        %927 = vmatprep.subr.bf16.mxu0 0
        %928 = vmatpush1.bf16.msra.mxu0 0
        %929 = vmatprep.subr.bf16.mxu0 0
        %930 = vmatpush1.bf16.msra.mxu0 0
        %931 = vmatprep.subr.bf16.mxu0 0
        %932 = vmatpush1.bf16.msra.mxu0 0
        %933 = vmatprep.subr.bf16.mxu0 0
        %934 = vmatpush1.bf16.msra.mxu0 0
        %935 = vmatprep.subr.bf16.mxu0 0
        %936 = vmatpush1.bf16.msra.mxu0 0
        %937 = vmatprep.subr.bf16.mxu0 0
        %938 = vmatpush1.bf16.msra.mxu0 0
        %939 = vmatprep.mubr.bf16.mxu0 0
        %940 = vmatmul.mubr.bf16.gmra.mrb[0].mxu0 %v905
        %v941 = vpop.f32.mrb[0].mxu0
        %v942 = vadd.f32 %v890, %v941
        %v943 = vpop.f32.mrb[0].mxu0
        %v944 = vpop.f32.mrb[0].mxu0
        %v945 = vpop.f32.mrb[0].mxu0
        %946 = vdwg.mxu0
        %v947 = vadd.f32 %v942, %v322
        %948 = vst.msk [vmem:[%s320] sm:$0xff] %vm323, %v947
        %s949 = sand.u32 %s185, 1
        %s950 = scalar_lea.sflag [#allocation4], %s949
        %s951 = sand.u32 %s185, 1
        %s952 = smul.addr %s951, 8
        %s953 = scalar_lea.vmem [#allocation8], %s952
        // Predicated region
        $region61: #{tpu_custom_call.1} parent=47 // pred_check
          %p954 = pneg %p195
        $region62: #{tpu_custom_call.1} parent=47 // pred_check_branch
          %956 = sbr.rel (%p954) target = $region64
        $region63: #{tpu_custom_call.1} parent=47 // pred_region
          %s958 = ssub.s32 128, 128
          %959 = vsyncadd %s950, %s958
          %s960 = smul.addr %s25, 128
          %s961 = scalar_lea.hbm %s7, %s960
          %s963 = sshll.u32 %s953, 4
          %s964 = int_to_ptr.vmem [resolvable:$true] %s963
          %966 = dma.vmem_to_hbm [thread:$0]  %s964, 128, %s961, %s950
        $region64: #{tpu_custom_call.1} parent=47 // pred_fallthru
          _
      $region48: #{tpu_custom_call.1} parent=5 // pred_fallthru
        _
      %p967 = scmp.le.s32.totalorder 2, %s20
      // Predicated region
      $region65: #{tpu_custom_call.1} parent=5 // pred_check
        %p968 = pneg %p967
      $region66: #{tpu_custom_call.1} parent=5 // pred_check_branch
        %970 = sbr.rel (%p968) target = $region68
      $region67: #{tpu_custom_call.1} parent=5 // pred_region
        %s971 = ssub.s32 %s20, 2
        // Predicated region
        $region69: #{tpu_custom_call.1} parent=67 // pred_check
          %p972 = pneg %p201
        $region70: #{tpu_custom_call.1} parent=67 // pred_check_branch
          %974 = sbr.rel (%p972) target = $region72
        $region71: #{tpu_custom_call.1} parent=67 // pred_region
          %s975 = sand.u32 %s186, 1
          %s976 = scalar_lea.sflag [#allocation4], %s975
          %s977 = sand.u32 %s186, 1
          %s978 = smul.addr %s977, 8
          %s979 = scalar_lea.vmem [#allocation8], %s978
          %980 = dma.done %s976, 128
        $region72: #{tpu_custom_call.1} parent=67 // pred_fallthru
          _
      $region68: #{tpu_custom_call.1} parent=5 // pred_fallthru
        _
    $region6: #{tpu_custom_call.1} parent=1 // loop_footer
      %s24 = sadd.s32 1, %s20
    $region7: #{tpu_custom_call.1} parent=1 // loop_footer_branch
      %19 = sbr.rel target = $region3
    $region8: #{tpu_custom_call.1} parent=1 // loop_exit
      _
    %981 = vsyncpa [#allocation3], 1
    %s982 = scalar_lea.sflag [#allocation3], 1
    %983 = vsyncpa %s982, 1
    %984 = vsyncpa [#allocation6], 1
    %985 = vsyncpa [#allocation4], 1
    %s986 = scalar_lea.sflag [#allocation4], 1
    %987 = vsyncpa %s986, 1

</llo_original>
